<compile_context>
chip_gen: v7x
topology: tpu7x:2x2x1
jax: 0.10.0
libtpu: 0.0.40
codegen_flags: <defaults>
</compile_context>

<pallas_src>
import functools

import jax
import jax.numpy as jnp
from jax import lax
from jax.experimental import pallas as pl
from jax.experimental.pallas import tpu as pltpu


def _sg_body(protos_ref, key_ref, val_ref, slots_ref, dots_ref, *, inv_temp, eps):
    """Per-grid-step body. val_ref=None means val aliases key (deduped DMA)."""
    p_n = protos_ref[...]                        # (K, D), pre-normalized, stream dtype
    bb, L, D = key_ref.shape

    x_all = key_ref[...].reshape(bb * L, D)      # merge leading dims (layout-trivial)

    # Per-token 1/max(||x||, eps): statistics in f32.  The scale is applied to
    # the f32 dots accumulation below, never to the (L, D) tile itself.
    xf = x_all.astype(jnp.float32)
    sumsq = jnp.sum(xf * xf, axis=-1)                              # (bb*L,)
    inv_norm = lax.rsqrt(jnp.maximum(sumsq, eps * eps))            # == 1/max(||x||, eps)

    # dots[k, t] = <p_n[k], x[t]> / max(||x[t]||, eps): one MXU pass over all
    # bb*L tokens, contracting the last dims directly (no transpose), f32 acc.
    dots_all = lax.dot_general(p_n, x_all, (((1,), (1,)), ((), ())),
                               preferred_element_type=jnp.float32)  # (K, bb*L)
    dots_all = dots_all * inv_norm[None, :]

    for b in range(bb):                          # small static unroll (bb <= 4)
        dots_b = dots_all[:, b * L:(b + 1) * L]                     # (K, L) f32
        dots_ref[b] = dots_b.astype(dots_ref.dtype)

        # softmax over prototypes (dim=1 of (B, K, L) -> axis 0 here), + eps.
        logits = dots_b * inv_temp
        e = jnp.exp(logits - jnp.max(logits, axis=0, keepdims=True))
        attn = e * (1.0 / jnp.sum(e, axis=0, keepdims=True)) + eps   # (K, L)

        # normalize over tokens (dim=2 of (B, K, L) -> axis 1 here).
        w = attn * (1.0 / jnp.sum(attn, axis=1, keepdims=True))      # (K, L)

        # slots[k, d] = sum_l w[k, l] * val[l, d]
        v_b = x_all[b * L:(b + 1) * L, :] if val_ref is None else val_ref[b]
        slots_ref[b] = jnp.dot(w.astype(v_b.dtype), v_b,
                               preferred_element_type=jnp.float32
                               ).astype(slots_ref.dtype)


def _sg_kernel_shared(protos_ref, key_ref, slots_ref, dots_ref, **kw):
    _sg_body(protos_ref, key_ref, None, slots_ref, dots_ref, **kw)


def _sg_kernel_separate(protos_ref, key_ref, val_ref, slots_ref, dots_ref, **kw):
    _sg_body(protos_ref, key_ref, val_ref, slots_ref, dots_ref, **kw)


def _pick_block_b(batch, L, D, K, itemsize, n_kv_streams, budget_bytes,
                  max_bb=4, min_grid_steps=4):
    """Largest divisor of `batch` whose double-buffered in/out blocks fit the
    budget, while keeping enough grid steps for megacore sharding + pipeline
    overlap and bounding the per-step f32 softmax intermediates."""
    # Per-batch f32 intermediates (dots/e/attn/w ~ K*L, slots ~ K*D): when
    # large, keep the static unroll short to limit vreg / spill pressure.
    if K * (L + D) * 4 > (512 << 10):
        max_bb = min(max_bb, 2)

    cap = min(max_bb, batch, max(1, batch // min_grid_steps))
    cap = max(cap, 1)

    def footprint(bb):
        stream_in = n_kv_streams * bb * L * D * itemsize
        stream_out = bb * K * (D + L) * itemsize
        return 2 * (stream_in + stream_out)          # double-buffered

    bb = cap
    while bb > 1 and (batch % bb != 0 or footprint(bb) > budget_bytes):
        bb -= 1
    return bb


def semantic_grouping_forward(prototypes, key, val=None, temp=0.07,
                              block_b=None, mxu_dtype=None):
    """Pallas implementation of SemanticGrouping.forward (onehot=False).

    prototypes: (K, D);  key, val: (B, L, D).
    Returns (slots (B, K, D), dots (B, K, L)).

    mxu_dtype: optionally cast the streamed operands (prototypes/key/val) to a
    narrower matmul dtype (e.g. jnp.bfloat16 on v5e).  Default None keeps the
    input dtype for exact parity with the f32 reference.
    """
    shared_val = (val is None) or (val is key)
    if val is None:
        val = key

    B, L, D = key.shape
    K, Dp = prototypes.shape
    assert Dp == D
    eps = 1e-6 if key.dtype == jnp.float16 else 1e-12    # matches the module

    # --- hoisted, batch-invariant prototype normalization (done once, in f32) ---
    p = prototypes.astype(jnp.float32)
    p_n = p / jnp.maximum(jnp.linalg.norm(p, axis=-1, keepdims=True), eps)

    stream_dtype = key.dtype if mxu_dtype is None else jnp.dtype(mxu_dtype)
    p_n = p_n.astype(stream_dtype)
    key_s = key if key.dtype == stream_dtype else key.astype(stream_dtype)
    val_s = None
    if not shared_val:
        val_s = val if val.dtype == stream_dtype else val.astype(stream_dtype)

    # Physical per-core VMEM for budgeting (conservative fallback = v7x 64 MiB).
    try:
        phys_vmem = int(pltpu.get_tpu_info().vmem_capacity_bytes)
    except Exception:
        phys_vmem = 64 << 20
    budget = min(phys_vmem // 3, 24 << 20)

    in_isz = jnp.dtype(stream_dtype).itemsize
    out_isz = jnp.dtype(key.dtype).itemsize
    n_kv = 1 if shared_val else 2
    if block_b is None:
        block_b = _pick_block_b(B, L, D, K, max(in_isz, out_isz), n_kv, budget)
    assert B % block_b == 0
    grid = (B // block_b,)

    kern_kw = dict(inv_temp=float(1.0 / temp), eps=float(eps))

    proto_spec = pl.BlockSpec((K, D), lambda i: (0, 0))
    # pipeline_mode=pl.Buffered(3) is a possible further knob when grid >= 4;
    # left at the default double-buffering for compile robustness.
    kv_spec = pl.BlockSpec((block_b, L, D), lambda i: (i, 0, 0))
    out_specs = [
        pl.BlockSpec((block_b, K, D), lambda i: (i, 0, 0)),   # slots
        pl.BlockSpec((block_b, K, L), lambda i: (i, 0, 0)),   # dots
    ]
    out_shape = (
        jax.ShapeDtypeStruct((B, K, D), key.dtype),
        jax.ShapeDtypeStruct((B, K, L), key.dtype),
    )

    if shared_val:
        kernel = functools.partial(_sg_kernel_shared, **kern_kw)
        in_specs = [proto_spec, kv_spec]
        args = (p_n, key_s)
    else:
        kernel = functools.partial(_sg_kernel_separate, **kern_kw)
        in_specs = [proto_spec, kv_spec, kv_spec]
        args = (p_n, key_s, val_s)

    # VMEM: double-buffered streamed in/out blocks + resident prototypes,
    # +25% headroom, capped well under the physical size.
    needed = (2 * n_kv * block_b * L * D + 2 * K * D) * in_isz \
        + 2 * block_b * K * (D + L) * out_isz
    vmem_limit = int(min(max(needed + needed // 4, 16 << 20),
                         min(phys_vmem // 2, 40 << 20)))
    vmem_limit = max(vmem_limit, needed + (1 << 20))

    slots, dots = pl.pallas_call(
        kernel,
        out_shape=out_shape,
        grid_spec=pltpu.PrefetchScalarGridSpec(
            num_scalar_prefetch=0,
            grid=grid,
            in_specs=in_specs,
            out_specs=out_specs,
        ),
        compiler_params=pltpu.CompilerParams(
            dimension_semantics=("parallel",),
            vmem_limit_bytes=vmem_limit,
        ),
    )(*args)
    return slots, dots


def _reference_forward(prototypes, key, val=None, temp=0.07):
    """Pure-JAX reference mirroring the PyTorch module (onehot=False)."""
    if val is None:
        val = key
    eps = 1e-12
    p_n = prototypes / jnp.maximum(
        jnp.linalg.norm(prototypes, axis=-1, keepdims=True), eps)
    k_n = key / jnp.maximum(jnp.linalg.norm(key, axis=-1, keepdims=True), eps)
    dots = jnp.einsum('kd,bld->bkl', p_n, k_n)
    attn = jax.nn.softmax(dots / temp, axis=1) + eps
    slots = jnp.einsum('bld,bkl->bkd', val, attn / attn.sum(axis=2, keepdims=True))
    return slots, dots


if __name__ == "__main__":
    # Small, deterministic example shapes consistent with the module:
    B, L, D = 2, 64, 32           # batch, tokens (e.g. 8x8 flattened), feature dim
    K = 16                        # num_prototypes_patch

    root = jax.random.PRNGKey(0)
    k_proto, k_key, k_val = jax.random.split(root, 3)

    # nn.Embedding default init ~ N(0, 1)
    prototypes = jax.random.normal(k_proto, (K, D), dtype=jnp.float32)
    key = jax.random.normal(k_key, (B, L, D), dtype=jnp.float32)
    val = jax.random.normal(k_val, (B, L, D), dtype=jnp.float32)

    # Separate-val path.
    slots, dots = semantic_grouping_forward(prototypes, key, val, temp=0.07)
    slots = jax.block_until_ready(slots)
    dots = jax.block_until_ready(dots)

    slots_ref, dots_ref = _reference_forward(prototypes, key, val, temp=0.07)
    assert slots.shape == (B, K, D) and dots.shape == (B, K, L)
    assert jnp.allclose(dots, dots_ref, atol=1e-4, rtol=1e-4)
    assert jnp.allclose(slots, slots_ref, atol=1e-4, rtol=1e-4)

    # Shared val==key path (val=None), which dedupes the key/val DMA stream.
    slots2, dots2 = semantic_grouping_forward(prototypes, key, None, temp=0.07)
    slots2 = jax.block_until_ready(slots2)
    dots2 = jax.block_until_ready(dots2)
    slots2_ref, dots2_ref = _reference_forward(prototypes, key, None, temp=0.07)
    assert jnp.allclose(dots2, dots2_ref, atol=1e-4, rtol=1e-4)
    assert jnp.allclose(slots2, slots2_ref, atol=1e-4, rtol=1e-4)

    print("KERNEL_OK")
</pallas_src>

<mosaic_0001>
module attributes {stable_mosaic.version = 11 : i64} {
  func.func @_sg_kernel_separate(%arg0: i32, %arg1: memref<16x32xf32, #tpu.memory_space<vmem>>, %arg2: memref<1x64x32xf32, #tpu.memory_space<vmem>>, %arg3: memref<1x64x32xf32, #tpu.memory_space<vmem>>, %arg4: memref<1x16x32xf32, #tpu.memory_space<vmem>>, %arg5: memref<1x16x64xf32, #tpu.memory_space<vmem>>) attributes {dimension_semantics = [#tpu.dimension_semantics<parallel>], iteration_bounds = array<i64: 2>, scalar_prefetch = 0 : i64, scratch_operands = 0 : i64, tpu.core_type = #tpu.core_type<tc>, window_params = [{pipeline_mode = #tpu.pipeline_mode<synchronous>, transform_indices = @transform_0, window_bounds = array<i64: 16, 32>}, {transform_indices = @transform_1, window_bounds = array<i64: 1, 64, 32>}, {transform_indices = @transform_2, window_bounds = array<i64: 1, 64, 32>}, {transform_indices = @transform_3, window_bounds = array<i64: 1, 16, 32>}, {transform_indices = @transform_4, window_bounds = array<i64: 1, 16, 64>}]} {
    %c0 = arith.constant 0 : index
    %c0_0 = arith.constant 0 : index
    %0 = vector.load %arg1[%c0, %c0_0] : memref<16x32xf32, #tpu.memory_space<vmem>>, vector<16x32xf32>
    %c0_1 = arith.constant 0 : index
    %c0_2 = arith.constant 0 : index
    %c0_3 = arith.constant 0 : index
    %1 = vector.load %arg2[%c0_1, %c0_2, %c0_3] : memref<1x64x32xf32, #tpu.memory_space<vmem>>, vector<1x64x32xf32>
    %2 = vector.shape_cast %1 : vector<1x64x32xf32> to vector<64x32xf32>
    %3 = arith.mulf %2, %2 : vector<64x32xf32>
    %cst = arith.constant dense<0.000000e+00> : vector<64xf32>
    %4 = vector.multi_reduction <add>, %3, %cst [1] : vector<64x32xf32> to vector<64xf32>
    %cst_4 = arith.constant 1.000000e-24 : f32
    %5 = vector.broadcast %cst_4 : f32 to vector<64xf32>
    %6 = arith.maximumf %4, %5 : vector<64xf32>
    %7 = math.rsqrt %6 : vector<64xf32>
    %cst_5 = arith.constant dense<0.000000e+00> : vector<16x64xf32>
    %8 = tpu.matmul %0, %2, %cst_5 {dimension_numbers = #tpu.dot_dimension_numbers<[1], [1], [0], [0], [0, 0, 1, 0], [], []>} : vector<16x32xf32>, vector<64x32xf32>, vector<16x64xf32> -> vector<16x64xf32>
    %9 = vector.shape_cast %7 : vector<64xf32> to vector<1x64xf32>
    %10 = vector.broadcast %9 : vector<1x64xf32> to vector<16x64xf32>
    %11 = arith.mulf %8, %10 : vector<16x64xf32>
    %c0_6 = arith.constant 0 : index
    %c0_7 = arith.constant 0 : index
    %c0_8 = arith.constant 0 : index
    %12 = vector.load %arg5[%c0_6, %c0_7, %c0_8] : memref<1x16x64xf32, #tpu.memory_space<vmem>>, vector<1x16x64xf32>
    %13 = vector.shape_cast %12 : vector<1x16x64xf32> to vector<16x64xf32>
    %14 = vector.shape_cast %11 : vector<16x64xf32> to vector<1x16x64xf32>
    tpu.vector_store %arg5[%c0_6, %c0_7, %c0_8], %14 {strides = array<i32>} : memref<1x16x64xf32, #tpu.memory_space<vmem>>, vector<1x16x64xf32>,
    %cst_9 = arith.constant 14.2857141 : f32
    %15 = vector.broadcast %cst_9 : f32 to vector<16x64xf32>
    %16 = arith.mulf %11, %15 : vector<16x64xf32>
    %cst_10 = arith.constant dense<0xFF800000> : vector<64xf32>
    %17 = vector.multi_reduction <maximumf>, %16, %cst_10 [0] : vector<16x64xf32> to vector<64xf32>
    %18 = vector.shape_cast %17 : vector<64xf32> to vector<1x64xf32>
    %19 = vector.broadcast %18 : vector<1x64xf32> to vector<16x64xf32>
    %20 = arith.subf %16, %19 : vector<16x64xf32>
    %21 = math.exp %20 : vector<16x64xf32>
    %cst_11 = arith.constant dense<0.000000e+00> : vector<64xf32>
    %22 = vector.multi_reduction <add>, %21, %cst_11 [0] : vector<16x64xf32> to vector<64xf32>
    %23 = vector.shape_cast %22 : vector<64xf32> to vector<1x64xf32>
    %cst_12 = arith.constant 1.000000e+00 : f32
    %24 = vector.broadcast %cst_12 : f32 to vector<1x64xf32>
    %25 = arith.divf %24, %23 : vector<1x64xf32>
    %26 = vector.broadcast %25 : vector<1x64xf32> to vector<16x64xf32>
    %27 = arith.mulf %21, %26 : vector<16x64xf32>
    %cst_13 = arith.constant 9.99999996E-13 : f32
    %28 = vector.broadcast %cst_13 : f32 to vector<16x64xf32>
    %29 = arith.addf %27, %28 : vector<16x64xf32>
    %cst_14 = arith.constant dense<0.000000e+00> : vector<16xf32>
    %30 = vector.multi_reduction <add>, %29, %cst_14 [1] : vector<16x64xf32> to vector<16xf32>
    %31 = vector.shape_cast %30 : vector<16xf32> to vector<16x1xf32>
    %cst_15 = arith.constant 1.000000e+00 : f32
    %32 = vector.broadcast %cst_15 : f32 to vector<16x1xf32>
    %33 = arith.divf %32, %31 : vector<16x1xf32>
    %34 = vector.broadcast %33 : vector<16x1xf32> to vector<16x64xf32>
    %35 = arith.mulf %29, %34 : vector<16x64xf32>
    %c0_16 = arith.constant 0 : index
    %c0_17 = arith.constant 0 : index
    %c0_18 = arith.constant 0 : index
    %36 = vector.load %arg3[%c0_16, %c0_17, %c0_18] : memref<1x64x32xf32, #tpu.memory_space<vmem>>, vector<1x64x32xf32>
    %37 = vector.shape_cast %36 : vector<1x64x32xf32> to vector<64x32xf32>
    %cst_19 = arith.constant dense<0.000000e+00> : vector<16x32xf32>
    %38 = tpu.matmul %35, %37, %cst_19 {dimension_numbers = #tpu.dot_dimension_numbers<[1], [0], [0], [1], [0, 0, 1, 1], [], []>} : vector<16x64xf32>, vector<64x32xf32>, vector<16x32xf32> -> vector<16x32xf32>
    %c0_20 = arith.constant 0 : index
    %c0_21 = arith.constant 0 : index
    %c0_22 = arith.constant 0 : index
    %39 = vector.load %arg4[%c0_20, %c0_21, %c0_22] : memref<1x16x32xf32, #tpu.memory_space<vmem>>, vector<1x16x32xf32>
    %40 = vector.shape_cast %39 : vector<1x16x32xf32> to vector<16x32xf32>
    %41 = vector.shape_cast %38 : vector<16x32xf32> to vector<1x16x32xf32>
    tpu.vector_store %arg4[%c0_20, %c0_21, %c0_22], %41 {strides = array<i32>} : memref<1x16x32xf32, #tpu.memory_space<vmem>>, vector<1x16x32xf32>,
    return
  }
  func.func @transform_0(%arg0: i32) -> (i32, i32) {
    %c0_i32 = arith.constant 0 : i32
    %c0_i32_0 = arith.constant 0 : i32
    %c0_i32_1 = arith.constant 0 : i32
    return %c0_i32, %c0_i32_0 : i32, i32
  }
  func.func @transform_1(%arg0: i32) -> (i32, i32, i32) {
    %c0_i32 = arith.constant 0 : i32
    %c0_i32_0 = arith.constant 0 : i32
    %c0_i32_1 = arith.constant 0 : i32
    return %arg0, %c0_i32, %c0_i32_0 : i32, i32, i32
  }
  func.func @transform_2(%arg0: i32) -> (i32, i32, i32) {
    %c0_i32 = arith.constant 0 : i32
    %c0_i32_0 = arith.constant 0 : i32
    %c0_i32_1 = arith.constant 0 : i32
    return %arg0, %c0_i32, %c0_i32_0 : i32, i32, i32
  }
  func.func @transform_3(%arg0: i32) -> (i32, i32, i32) {
    %c0_i32 = arith.constant 0 : i32
    %c0_i32_0 = arith.constant 0 : i32
    %c0_i32_1 = arith.constant 0 : i32
    return %arg0, %c0_i32, %c0_i32_0 : i32, i32, i32
  }
  func.func @transform_4(%arg0: i32) -> (i32, i32, i32) {
    %c0_i32 = arith.constant 0 : i32
    %c0_i32_0 = arith.constant 0 : i32
    %c0_i32_1 = arith.constant 0 : i32
    return %arg0, %c0_i32, %c0_i32_0 : i32, i32, i32
  }
}

</mosaic_0001>

<llo_original>
// kernel: tpu_custom_call.1
$region0: #{tpu_custom_call.1}
  #allocation0 [shape = 'u32[]', space=smem, size = 0x4, offset = 0x4, fixed_abs, tag = 'smem constant byte address 0x4 - core index']
  #allocation1 [shape = 'u32[144,128]{1,0:T(1,128)}', space=vmem, size = 0x12000, scoped, tag = 'internal scratch']
  %s0 = inlined_call_operand.vmem [shape: f32[16,32], index: 0, kind: input, shape index: {}]
  %s1 = inlined_call_operand.vmem [shape: f32[2,64,32], index: 1, kind: input, shape index: {}]
  %s2 = inlined_call_operand.vmem [shape: f32[2,64,32], index: 2, kind: input, shape index: {}]
  %s3 = inlined_call_operand.hbm [shape: f32[2,16,32], index: 3, kind: output, shape index: {0}]
  %s4 = inlined_call_operand.hbm [shape: f32[2,16,64], index: 4, kind: output, shape index: {1}]
  %5 = xla_tuple %s3, %s4
  %s6 = sld [smem:[#allocation0]]
  $region53: #{tpu_custom_call.1} parent=0
    _
  %s8 = ssub.s32 1, %s6
  %s9 = scalar_select 0, %s8, %s6
  $region1: #{tpu_custom_call.1} parent=0
    #allocation2 [shape = 'u8[16384]{0}', space=vmem, size = 0x4000, scoped, tag = 'output window, operand 0']
    #allocation3 [shape = 's32[2]{0}', space=sflag, size = 0x8, scoped, tag = 'scoped memory for tpu_custom_call.1']
    #allocation4 [shape = 'u8[16384]{0}', space=vmem, size = 0x4000, scoped, tag = 'output window, operand 1']
    #allocation5 [shape = 's32[2]{0}', space=sflag, size = 0x8, scoped, tag = 'scoped memory for tpu_custom_call.1']
    %10 = vsyncpa [#allocation3], 0
    %s11 = scalar_lea.sflag [#allocation3], 1
    %12 = vsyncpa %s11, 0
    %13 = vsyncpa [#allocation5], 0
    %s14 = scalar_lea.sflag [#allocation5], 1
    %15 = vsyncpa %s14, 0
    loop: start=0, step=1, limit=4
    $region2: #{tpu_custom_call.1} parent=1 // loop_pre_header
      _
    $region3: #{tpu_custom_call.1} parent=1 // loop_header
      %s17 = sphi 0, %s21
      %p18 = scmp.ge.s32.totalorder %s17, 4
      %s25 = sphi 0, %s25
      %s27 = sphi 0, %s25
      %s28 = sphi 0, %s27
      %s42 = sphi 0, %s28
      %s48 = sphi 0, %s50
      %s51 = sphi 0, %s48
      %s52 = sphi 0, %s51
      %s68 = sphi 0, %s52
      %s74 = sphi 0, %s76
      %s77 = sphi 0, %s74
      %s78 = sphi 0, %s77
      %s94 = sphi 0, %s78
      %s100 = sphi 0, %s102
      %s103 = sphi 0, %s100
      %s104 = sphi 0, %s103
      %s120 = sphi 0, %s104
      %s126 = sphi 0, %s128
      %s129 = sphi 0, %s126
      %s130 = sphi 0, %s129
      %s146 = sphi 0, %s130
    $region4: #{tpu_custom_call.1} parent=1 // loop_header_branch
      %20 = sbr.rel (%p18) target = $region8
    $region5: #{tpu_custom_call.1} parent=1 // loop_body
      %s22 = ssub.s32 %s17, 1
      %s23 = ssub.s32 %s17, 2
      %s24 = sadd.s32 %s17, 1
      %s26 = sadd.s32 %s25, 1
      %p29 = scmp.eq.s32.totalorder %s17, 1
      %p30 = scmp.ne.s32.totalorder %s25, %s27
      %p31 = scmp.eq.s32.totalorder %s17, 0
      %p32 = por %p30, %p31
      %p33 = scmp.ne.s32.totalorder %s25, %s27
      %p34 = scmp.eq.s32.totalorder %s22, 1
      %p35 = por %p33, %p34
      %p36 = scmp.ne.s32.totalorder %s27, %s28
      %p37 = scmp.eq.s32.totalorder %s22, 0
      %p38 = por %p36, %p37
      %p39 = scmp.ne.s32.totalorder %s27, %s28
      %p40 = scmp.eq.s32.totalorder %s23, 1
      %p41 = por %p39, %p40
      %p43 = scmp.ne.s32.totalorder %s28, %s42
      %p44 = scmp.eq.s32.totalorder %s23, 0
      %p45 = por %p43, %p44
      %s46 = ssub.s32 %s17, %s24
      %p47 = scmp.eq.s32.totalorder %s46, 0
      %s49 = sadd.s32 %s48, 1
      %s50 = scalar_select %p47, %s48, %s49
      %p53 = pneg %p47
      %p54 = scmp.eq.s32.totalorder %s17, 1
      %p55 = por %p53, %p54
      %p56 = scmp.ne.s32.totalorder %s48, %s51
      %p57 = scmp.eq.s32.totalorder %s17, 0
      %p58 = por %p56, %p57
      %p59 = scmp.ne.s32.totalorder %s48, %s51
      %p60 = scmp.eq.s32.totalorder %s22, 1
      %p61 = por %p59, %p60
      %p62 = scmp.ne.s32.totalorder %s51, %s52
      %p63 = scmp.eq.s32.totalorder %s22, 0
      %p64 = por %p62, %p63
      %p65 = scmp.ne.s32.totalorder %s51, %s52
      %p66 = scmp.eq.s32.totalorder %s23, 1
      %p67 = por %p65, %p66
      %p69 = scmp.ne.s32.totalorder %s52, %s68
      %p70 = scmp.eq.s32.totalorder %s23, 0
      %p71 = por %p69, %p70
      %s72 = ssub.s32 %s17, %s24
      %p73 = scmp.eq.s32.totalorder %s72, 0
      %s75 = sadd.s32 %s74, 1
      %s76 = scalar_select %p73, %s74, %s75
      %p79 = pneg %p73
      %p80 = scmp.eq.s32.totalorder %s17, 1
      %p81 = por %p79, %p80
      %p82 = scmp.ne.s32.totalorder %s74, %s77
      %p83 = scmp.eq.s32.totalorder %s17, 0
      %p84 = por %p82, %p83
      %p85 = scmp.ne.s32.totalorder %s74, %s77
      %p86 = scmp.eq.s32.totalorder %s22, 1
      %p87 = por %p85, %p86
      %p88 = scmp.ne.s32.totalorder %s77, %s78
      %p89 = scmp.eq.s32.totalorder %s22, 0
      %p90 = por %p88, %p89
      %p91 = scmp.ne.s32.totalorder %s77, %s78
      %p92 = scmp.eq.s32.totalorder %s23, 1
      %p93 = por %p91, %p92
      %p95 = scmp.ne.s32.totalorder %s78, %s94
      %p96 = scmp.eq.s32.totalorder %s23, 0
      %p97 = por %p95, %p96
      %s98 = ssub.s32 %s17, %s24
      %p99 = scmp.eq.s32.totalorder %s98, 0
      %s101 = sadd.s32 %s100, 1
      %s102 = scalar_select %p99, %s100, %s101
      %p105 = pneg %p99
      %p106 = scmp.eq.s32.totalorder %s17, 1
      %p107 = por %p105, %p106
      %p108 = scmp.ne.s32.totalorder %s100, %s103
      %p109 = scmp.eq.s32.totalorder %s17, 0
      %p110 = por %p108, %p109
      %p111 = scmp.ne.s32.totalorder %s100, %s103
      %p112 = scmp.eq.s32.totalorder %s22, 1
      %p113 = por %p111, %p112
      %p114 = scmp.ne.s32.totalorder %s103, %s104
      %p115 = scmp.eq.s32.totalorder %s22, 0
      %p116 = por %p114, %p115
      %p117 = scmp.ne.s32.totalorder %s103, %s104
      %p118 = scmp.eq.s32.totalorder %s23, 1
      %p119 = por %p117, %p118
      %p121 = scmp.ne.s32.totalorder %s104, %s120
      %p122 = scmp.eq.s32.totalorder %s23, 0
      %p123 = por %p121, %p122
      %s124 = ssub.s32 %s17, %s24
      %p125 = scmp.eq.s32.totalorder %s124, 0
      %s127 = sadd.s32 %s126, 1
      %s128 = scalar_select %p125, %s126, %s127
      %p131 = pneg %p125
      %p132 = scmp.eq.s32.totalorder %s17, 1
      %p133 = por %p131, %p132
      %p134 = scmp.ne.s32.totalorder %s126, %s129
      %p135 = scmp.eq.s32.totalorder %s17, 0
      %p136 = por %p134, %p135
      %p137 = scmp.ne.s32.totalorder %s126, %s129
      %p138 = scmp.eq.s32.totalorder %s22, 1
      %p139 = por %p137, %p138
      %p140 = scmp.ne.s32.totalorder %s129, %s130
      %p141 = scmp.eq.s32.totalorder %s22, 0
      %p142 = por %p140, %p141
      %p143 = scmp.ne.s32.totalorder %s129, %s130
      %p144 = scmp.eq.s32.totalorder %s23, 1
      %p145 = por %p143, %p144
      %p147 = scmp.ne.s32.totalorder %s130, %s146
      %p148 = scmp.eq.s32.totalorder %s23, 0
      %p149 = por %p147, %p148
      %p150 = scmp.le.s32.totalorder 1, %s17
      %p151 = scmp.lt.s32.totalorder %s17, 3
      %p152 = pnand %p150, %p151
      %p153 = pneg %p152
      // Predicated region
      $region9: #{tpu_custom_call.1} parent=5 // pred_check
        _
      $region10: #{tpu_custom_call.1} parent=5 // pred_check_branch
        %155 = sbr.rel (%p152) target = $region12
      $region11: #{tpu_custom_call.1} parent=5 // pred_region
        %s156 = ssub.s32 %s17, 1
        // Predicated region
        $region13: #{tpu_custom_call.1} parent=11 // pred_check
          %p157 = pneg %p38
        $region14: #{tpu_custom_call.1} parent=11 // pred_check_branch
          %159 = sbr.rel (%p157) target = $region16
        $region15: #{tpu_custom_call.1} parent=11 // pred_region
          _
        $region16: #{tpu_custom_call.1} parent=11 // pred_fallthru
          _
      $region12: #{tpu_custom_call.1} parent=5 // pred_fallthru
        _
      %p160 = scmp.lt.s32.totalorder %s17, 2
      // Predicated region
      $region17: #{tpu_custom_call.1} parent=5 // pred_check
        %p161 = pneg %p160
      $region18: #{tpu_custom_call.1} parent=5 // pred_check_branch
        %163 = sbr.rel (%p161) target = $region20
      $region19: #{tpu_custom_call.1} parent=5 // pred_region
        // Predicated region
        $region21: #{tpu_custom_call.1} parent=19 // pred_check
          %p164 = pneg %p58
        $region22: #{tpu_custom_call.1} parent=19 // pred_check_branch
          %166 = sbr.rel (%p164) target = $region24
        $region23: #{tpu_custom_call.1} parent=19 // pred_region
          %p167 = scmp.lt.s32.totalorder %s17, 1
          %s168 = scalar_select %p167, %s17, 1
          %s169 = smul.addr %s168, 8
          %s170 = smul.addr %s169, 8
          %s171 = scalar_lea.vmem %s1, %s170
        $region24: #{tpu_custom_call.1} parent=19 // pred_fallthru
          _
        // Predicated region
        $region25: #{tpu_custom_call.1} parent=19 // pred_check
          %p172 = pneg %p84
        $region26: #{tpu_custom_call.1} parent=19 // pred_check_branch
          %174 = sbr.rel (%p172) target = $region28
        $region27: #{tpu_custom_call.1} parent=19 // pred_region
          %p175 = scmp.lt.s32.totalorder %s17, 1
          %s176 = scalar_select %p175, %s17, 1
          %s177 = smul.addr %s176, 8
          %s178 = smul.addr %s177, 8
          %s179 = scalar_lea.vmem %s2, %s178
        $region28: #{tpu_custom_call.1} parent=19 // pred_fallthru
          _
      $region20: #{tpu_custom_call.1} parent=5 // pred_fallthru
        _
      %p180 = scmp.le.s32.totalorder 1, %s17
      %p181 = scmp.lt.s32.totalorder %s17, 3
      %p182 = pnand %p180, %p181
      %p183 = pneg %p182
      // Predicated region
      $region29: #{tpu_custom_call.1} parent=5 // pred_check
        _
      $region30: #{tpu_custom_call.1} parent=5 // pred_check_branch
        %185 = sbr.rel (%p182) target = $region32
      $region31: #{tpu_custom_call.1} parent=5 // pred_region
        %s186 = ssub.s32 %s17, 1
        %p187 = pneg %p38
        %p188 = pneg %p35
        %p189 = scmp.lt.s32.totalorder %s22, 1
        %s190 = scalar_select %p189, %s22, 1
        %s191 = smul.addr %s190, 8
        %s192 = smul.addr %s191, 8
        %s193 = scalar_lea.vmem %s1, %s192
        %p194 = pneg %p64
        %p195 = pneg %p61
        %p196 = scmp.lt.s32.totalorder %s22, 1
        %s197 = scalar_select %p196, %s22, 1
        %s198 = smul.addr %s197, 8
        %s199 = smul.addr %s198, 8
        %s200 = scalar_lea.vmem %s2, %s199
        %p201 = pneg %p90
        %p202 = pneg %p87
        %p203 = pneg %p116
        %p204 = pneg %p113
        %s205 = sand.u32 %s103, 1
        %s206 = scalar_lea.sflag [#allocation3], %s205
        %s207 = sand.u32 %s103, 1
        %s208 = smul.addr %s207, 16
        %s209 = scalar_lea.vmem [#allocation2], %s208
        %p210 = pneg %p142
        %p211 = pneg %p139
        %s212 = sand.u32 %s129, 1
        %s213 = scalar_lea.sflag [#allocation5], %s212
        %s214 = sand.u32 %s129, 1
        %s215 = smul.addr %s214, 16
        %s216 = scalar_lea.vmem [#allocation4], %s215
        %p217 = scmp.lt.s32.totalorder %s22, 1
        %s218 = scalar_select %p217, %s22, 1
        %s219 = smul.addr %s218, 8
        %s220 = smul.addr %s219, 8
        %s221 = scalar_lea.vmem %s1, %s220
        %p222 = scmp.lt.s32.totalorder %s22, 1
        %s223 = scalar_select %p222, %s22, 1
        %s224 = smul.addr %s223, 8
        %s225 = smul.addr %s224, 8
        %s226 = scalar_lea.vmem %s2, %s225
        %v227 = vld [vmem:[%s0] sm:$0xff]
        %v228 = vld [vmem:[%s0 + $0x8] sm:$0xff]
        %v229 = vld [vmem:[%s221] sm:$0xff]
        %v230 = vld [vmem:[%s221 + $0x8] sm:$0xff]
        %v231 = vld [vmem:[%s221 + $0x10] sm:$0xff]
        %v232 = vld [vmem:[%s221 + $0x18] sm:$0xff]
        %v233 = vld [vmem:[%s221 + $0x20] sm:$0xff]
        %v234 = vld [vmem:[%s221 + $0x28] sm:$0xff]
        %v235 = vld [vmem:[%s221 + $0x30] sm:$0xff]
        %v236 = vld [vmem:[%s221 + $0x38] sm:$0xff]
        %v237 = vmul.f32 %v229, %v229
        %v238 = vmul.f32 %v230, %v230
        %v239 = vmul.f32 %v231, %v231
        %v240 = vmul.f32 %v232, %v232
        %v241 = vmul.f32 %v233, %v233
        %v242 = vmul.f32 %v234, %v234
        %v243 = vmul.f32 %v235, %v235
        %v244 = vmul.f32 %v236, %v236
        %vm245 = vcmask 261120
        %v246 = vsel %vm245, %v237, 0.0
        %247 = vadd.xlane.f32.xlu0 %v246
        %v248 = vpop.xlane.xlu0 %247
        %v249 = vsel %vm245, %v238, 0.0
        %250 = vadd.xlane.f32.xlu0 %v249
        %v251 = vpop.xlane.xlu0 %250
        %v252 = vsel %vm245, %v239, 0.0
        %253 = vadd.xlane.f32.xlu0 %v252
        %v254 = vpop.xlane.xlu0 %253
        %v255 = vsel %vm245, %v240, 0.0
        %256 = vadd.xlane.f32.xlu0 %v255
        %v257 = vpop.xlane.xlu0 %256
        %v258 = vsel %vm245, %v241, 0.0
        %259 = vadd.xlane.f32.xlu0 %v258
        %v260 = vpop.xlane.xlu0 %259
        %v261 = vsel %vm245, %v242, 0.0
        %262 = vadd.xlane.f32.xlu0 %v261
        %v263 = vpop.xlane.xlu0 %262
        %v264 = vsel %vm245, %v243, 0.0
        %265 = vadd.xlane.f32.xlu0 %v264
        %v266 = vpop.xlane.xlu0 %265
        %v267 = vsel %vm245, %v244, 0.0
        %268 = vadd.xlane.f32.xlu0 %v267
        %v269 = vpop.xlane.xlu0 %268
        %v270 = vmax.f32 %v248, 1e-24
        %v271 = vmax.f32 %v251, 1e-24
        %v272 = vmax.f32 %v254, 1e-24
        %v273 = vmax.f32 %v257, 1e-24
        %v274 = vmax.f32 %v260, 1e-24
        %v275 = vmax.f32 %v263, 1e-24
        %v276 = vmax.f32 %v266, 1e-24
        %v277 = vmax.f32 %v269, 1e-24
        %v278 = vrsqrt.pop %v270
        %v279 = vrsqrt.pop %v271
        %v280 = vrsqrt.pop %v272
        %v281 = vrsqrt.pop %v273
        %v282 = vrsqrt.pop %v274
        %v283 = vrsqrt.pop %v275
        %v284 = vrsqrt.pop %v276
        %v285 = vrsqrt.pop %v277
        %v287 = vsel %vm245, %v227, 0
        %v290 = vsel %vm245, %v228, 0
        %v293 = vsel %vm245, %v229, 0
        %v296 = vsel %vm245, %v230, 0
        %v299 = vsel %vm245, %v231, 0
        %v302 = vsel %vm245, %v232, 0
        %v305 = vsel %vm245, %v233, 0
        %v308 = vsel %vm245, %v234, 0
        %v311 = vsel %vm245, %v235, 0
        %v314 = vsel %vm245, %v236, 0
        %316 = vmatprep.subr.mxu0 0.0
        %317 = vmatpush1.xpose.msra.mxu0 %v293
        %318 = vmatprep.subr.mxu0 0.0
        %319 = vmatpush1.xpose.msra.mxu0 %v296
        %320 = vmatprep.subr.mxu0 0.0
        %321 = vmatpush1.xpose.msra.mxu0 %v299
        %322 = vmatprep.subr.mxu0 0.0
        %323 = vmatpush1.xpose.msra.mxu0 %v302
        %324 = vmatprep.subr.mxu0 0.0
        %325 = vmatpush1.xpose.msra.mxu0 %v305
        %326 = vmatprep.subr.mxu0 0.0
        %327 = vmatpush1.xpose.msra.mxu0 %v308
        %328 = vmatprep.subr.mxu0 0.0
        %329 = vmatpush1.xpose.msra.mxu0 %v311
        %330 = vmatprep.subr.mxu0 0.0
        %331 = vmatpush1.xpose.msra.mxu0 %v314
        %332 = vmatprep.subr.mxu0 0.0
        %333 = vmatpush1.xpose.msra.mxu0 0.0
        %334 = vmatprep.subr.mxu0 0.0
        %335 = vmatpush1.xpose.msra.mxu0 0.0
        %336 = vmatprep.subr.mxu0 0.0
        %337 = vmatpush1.xpose.msra.mxu0 0.0
        %338 = vmatprep.subr.mxu0 0.0
        %339 = vmatpush1.xpose.msra.mxu0 0.0
        %340 = vmatprep.subr.mxu0 0.0
        %341 = vmatpush1.xpose.msra.mxu0 0.0
        %342 = vmatprep.subr.mxu0 0.0
        %343 = vmatpush1.xpose.msra.mxu0 0.0
        %344 = vmatprep.subr.mxu0 0.0
        %345 = vmatpush1.xpose.msra.mxu0 0.0
        %346 = vmatprep.subr.mxu0 0.0
        %347 = vmatpush1.xpose.msra.mxu0 0.0
        %348 = vmatprep.subr.mxu0 0.0
        %349 = vmatpush1.xpose.msra.mxu0 0.0
        %350 = vmatprep.subr.mxu0 0.0
        %351 = vmatpush1.xpose.msra.mxu0 0.0
        %352 = vmatprep.subr.mxu0 0.0
        %353 = vmatpush1.xpose.msra.mxu0 0.0
        %354 = vmatprep.subr.mxu0 0.0
        %355 = vmatpush1.xpose.msra.mxu0 0.0
        %356 = vmatprep.subr.mxu0 0.0
        %357 = vmatpush1.xpose.msra.mxu0 0.0
        %358 = vmatprep.subr.mxu0 0.0
        %359 = vmatpush1.xpose.msra.mxu0 0.0
        %360 = vmatprep.subr.mxu0 0.0
        %361 = vmatpush1.xpose.msra.mxu0 0.0
        %362 = vmatprep.subr.mxu0 0.0
        %363 = vmatpush1.xpose.msra.mxu0 0.0
        %364 = vmatprep.subr.mxu0 0.0
        %365 = vmatpush1.xpose.msra.mxu0 0.0
        %366 = vmatprep.subr.mxu0 0.0
        %367 = vmatpush1.xpose.msra.mxu0 0.0
        %368 = vmatprep.subr.mxu0 0.0
        %369 = vmatpush1.xpose.msra.mxu0 0.0
        %370 = vmatprep.subr.mxu0 0.0
        %371 = vmatpush1.xpose.msra.mxu0 0.0
        %372 = vmatprep.subr.mxu0 0.0
        %373 = vmatpush1.xpose.msra.mxu0 0.0
        %374 = vmatprep.subr.mxu0 0.0
        %375 = vmatpush1.xpose.msra.mxu0 0.0
        %376 = vmatprep.subr.mxu0 0.0
        %377 = vmatpush1.xpose.msra.mxu0 0.0
        %378 = vmatprep.subr.mxu0 0.0
        %379 = vmatpush1.xpose.msra.mxu0 0.0
        %380 = vmatprep.mubr.f32.mxu0 0.0
        %381 = vmatmul.mubr.f32.gmra.mrb[0].mxu0 %v287
        %v382 = vpop.f32.mrb[0].mxu0
        %v383 = vadd.f32 0.0, %v382
        %v384 = vpop.f32.mrb[0].mxu0
        %385 = vmatprep.mubr.f32.mxu0 0.0
        %386 = vmatmul.mubr.f32.gmra.mrb[0].mxu0 %v290
        %v387 = vpop.f32.mrb[0].mxu0
        %v388 = vadd.f32 0.0, %v387
        %v389 = vpop.f32.mrb[0].mxu0
        %390 = vdwg.mxu0
        %v399 = vlaneseq
        %v400 = vand.u32 %v399, 127
        %v401 = vlaneseq
        %v402 = vshrl.u32 %v401, 7
        %v403 = vsub.s32 %v400, %v402
        %v404 = vrot.slane %v278, %v403
        %v405 = vadd.s32 %v400, 4294967288
        %v406 = vlaneseq
        %v407 = vshrl.u32 %v406, 7
        %v408 = vsub.s32 %v405, %v407
        %v409 = vrot.slane %v279, %v408
        %vm410 = vcmask 130112
        %v411 = vsel %vm410, %v409, %v404
        %v412 = vadd.s32 %v400, 4294967280
        %v413 = vlaneseq
        %v414 = vshrl.u32 %v413, 7
        %v415 = vsub.s32 %v412, %v414
        %v416 = vrot.slane %v280, %v415
        %vm417 = vcmask 195712
        %v418 = vsel %vm417, %v416, %v411
        %v419 = vadd.s32 %v400, 4294967272
        %v420 = vlaneseq
        %v421 = vshrl.u32 %v420, 7
        %v422 = vsub.s32 %v419, %v421
        %v423 = vrot.slane %v281, %v422
        %vm424 = vcmask 261312
        %v425 = vsel %vm424, %v423, %v418
        %v426 = vadd.s32 %v400, 4294967264
        %v427 = vlaneseq
        %v428 = vshrl.u32 %v427, 7
        %v429 = vsub.s32 %v426, %v428
        %v430 = vrot.slane %v282, %v429
        %vm431 = vcmask 326912
        %v432 = vsel %vm431, %v430, %v425
        %v433 = vadd.s32 %v400, 4294967256
        %v434 = vlaneseq
        %v435 = vshrl.u32 %v434, 7
        %v436 = vsub.s32 %v433, %v435
        %v437 = vrot.slane %v283, %v436
        %vm438 = vcmask 392512
        %v439 = vsel %vm438, %v437, %v432
        %v440 = vadd.s32 %v400, 4294967248
        %v441 = vlaneseq
        %v442 = vshrl.u32 %v441, 7
        %v443 = vsub.s32 %v440, %v442
        %v444 = vrot.slane %v284, %v443
        %vm445 = vcmask 458112
        %v446 = vsel %vm445, %v444, %v439
        %v447 = vadd.s32 %v400, 4294967240
        %v448 = vlaneseq
        %v449 = vshrl.u32 %v448, 7
        %v450 = vsub.s32 %v447, %v449
        %v451 = vrot.slane %v285, %v450
        %vm452 = vcmask 523712
        %v453 = vsel %vm452, %v451, %v446
        %vm454 = vcmask 1042434
        %v455 = vsel %vm454, %v453, %v453
        %vm456 = vcmask 1043459
        %v457 = vsel %vm456, %v453, %v455
        %vm458 = vcmask 1044484
        %v459 = vsel %vm458, %v453, %v457
        %vm460 = vcmask 1045509
        %v461 = vsel %vm460, %v453, %v459
        %vm462 = vcmask 1046534
        %v463 = vsel %vm462, %v453, %v461
        %vm464 = vcmask 1047559
        %v465 = vsel %vm464, %v453, %v463
        %v467 = vmul.f32 %v383, %v465
        %v468 = vmul.f32 %v388, %v465
        %vm469 = vcmask 523264
        %470 = vst.msk [vmem:[%s216] sm:$0xff] %vm469, %v467
        %471 = vst.msk [vmem:[%s216 + $0x8] sm:$0xff] %vm469, %v468
        %v472 = vmul.f32 %v467, 14.285714
        %v473 = vmul.f32 %v468, 14.285714
        %v474 = vsel %vm469, %v472, -inf
        %v475 = vsel %vm469, %v473, -inf
        %v476 = vmax.f32 %v474, %v475
        %v477 = vrot.slane %v476, 4
        %v478 = vmax.f32 %v476, %v477
        %v479 = vrot.slane %v478, 2
        %v480 = vmax.f32 %v478, %v479
        %v481 = vrot.slane %v480, 1
        %v482 = vmax.f32 %v480, %v481
        %v483 = vsub.f32 %v472, %v482
        %v484 = vsub.f32 %v473, %v482
        %v485 = vmul.f32 %v483, 1.442695
        %v486 = vpow.pop %v485
        %v487 = vmul.f32 %v484, 1.442695
        %v488 = vpow.pop %v487
        %v489 = vsel %vm469, %v486, 0.0
        %v490 = vsel %vm469, %v488, 0.0
        %v491 = vadd.f32 %v489, %v490
        %v492 = vrot.slane %v491, 4
        %v493 = vadd.f32 %v491, %v492
        %v494 = vrot.slane %v493, 2
        %v495 = vadd.f32 %v493, %v494
        %v496 = vrot.slane %v495, 1
        %v497 = vadd.f32 %v495, %v496
        %v498 = vrcp.pop %v497
        %v499 = vmul.f32 1.0, %v498
        %v500 = vmul.f32 %v486, %v499
        %v501 = vmul.f32 %v488, %v499
        %v502 = vadd.f32 %v500, 1e-12
        %v503 = vadd.f32 %v501, 1e-12
        %v504 = vsel %vm469, %v502, 0.0
        %505 = vadd.xlane.f32.xlu0 %v504
        %v506 = vpop.xlane.xlu0 %505
        %v507 = vsel %vm469, %v503, 0.0
        %508 = vadd.xlane.f32.xlu0 %v507
        %v509 = vpop.xlane.xlu0 %508
        %v510 = vrcp.pop %v506
        %v511 = vmul.f32 1.0, %v510
        %v512 = vrcp.pop %v509
        %v513 = vmul.f32 1.0, %v512
        %v514 = vmul.f32 %v502, %v511
        %v515 = vmul.f32 %v503, %v513
        %v516 = vld [vmem:[%s226] sm:$0xff]
        %v517 = vld [vmem:[%s226 + $0x8] sm:$0xff]
        %v518 = vld [vmem:[%s226 + $0x10] sm:$0xff]
        %v519 = vld [vmem:[%s226 + $0x18] sm:$0xff]
        %v520 = vld [vmem:[%s226 + $0x20] sm:$0xff]
        %v521 = vld [vmem:[%s226 + $0x28] sm:$0xff]
        %v522 = vld [vmem:[%s226 + $0x30] sm:$0xff]
        %v523 = vld [vmem:[%s226 + $0x38] sm:$0xff]
        %v525 = vsel %vm469, %v514, 0
        %v528 = vsel %vm469, %v515, 0
        %530 = vmatprep.subr.mxu0 0.0
        %531 = vmatpush1.msra.mxu0 %v516
        %532 = vmatprep.subr.mxu0 0.0
        %533 = vmatpush1.msra.mxu0 %v517
        %534 = vmatprep.subr.mxu0 0.0
        %535 = vmatpush1.msra.mxu0 %v518
        %536 = vmatprep.subr.mxu0 0.0
        %537 = vmatpush1.msra.mxu0 %v519
        %538 = vmatprep.subr.mxu0 0.0
        %539 = vmatpush1.msra.mxu0 %v520
        %540 = vmatprep.subr.mxu0 0.0
        %541 = vmatpush1.msra.mxu0 %v521
        %542 = vmatprep.subr.mxu0 0.0
        %543 = vmatpush1.msra.mxu0 %v522
        %544 = vmatprep.subr.mxu0 0.0
        %545 = vmatpush1.msra.mxu0 %v523
        %546 = vmatprep.subr.mxu0 0.0
        %547 = vmatpush1.msra.mxu0 0.0
        %548 = vmatprep.subr.mxu0 0.0
        %549 = vmatpush1.msra.mxu0 0.0
        %550 = vmatprep.subr.mxu0 0.0
        %551 = vmatpush1.msra.mxu0 0.0
        %552 = vmatprep.subr.mxu0 0.0
        %553 = vmatpush1.msra.mxu0 0.0
        %554 = vmatprep.subr.mxu0 0.0
        %555 = vmatpush1.msra.mxu0 0.0
        %556 = vmatprep.subr.mxu0 0.0
        %557 = vmatpush1.msra.mxu0 0.0
        %558 = vmatprep.subr.mxu0 0.0
        %559 = vmatpush1.msra.mxu0 0.0
        %560 = vmatprep.subr.mxu0 0.0
        %561 = vmatpush1.msra.mxu0 0.0
        %562 = vmatprep.subr.mxu0 0.0
        %563 = vmatpush1.msra.mxu0 0.0
        %564 = vmatprep.subr.mxu0 0.0
        %565 = vmatpush1.msra.mxu0 0.0
        %566 = vmatprep.subr.mxu0 0.0
        %567 = vmatpush1.msra.mxu0 0.0
        %568 = vmatprep.subr.mxu0 0.0
        %569 = vmatpush1.msra.mxu0 0.0
        %570 = vmatprep.subr.mxu0 0.0
        %571 = vmatpush1.msra.mxu0 0.0
        %572 = vmatprep.subr.mxu0 0.0
        %573 = vmatpush1.msra.mxu0 0.0
        %574 = vmatprep.subr.mxu0 0.0
        %575 = vmatpush1.msra.mxu0 0.0
        %576 = vmatprep.subr.mxu0 0.0
        %577 = vmatpush1.msra.mxu0 0.0
        %578 = vmatprep.subr.mxu0 0.0
        %579 = vmatpush1.msra.mxu0 0.0
        %580 = vmatprep.subr.mxu0 0.0
        %581 = vmatpush1.msra.mxu0 0.0
        %582 = vmatprep.subr.mxu0 0.0
        %583 = vmatpush1.msra.mxu0 0.0
        %584 = vmatprep.subr.mxu0 0.0
        %585 = vmatpush1.msra.mxu0 0.0
        %586 = vmatprep.subr.mxu0 0.0
        %587 = vmatpush1.msra.mxu0 0.0
        %588 = vmatprep.subr.mxu0 0.0
        %589 = vmatpush1.msra.mxu0 0.0
        %590 = vmatprep.subr.mxu0 0.0
        %591 = vmatpush1.msra.mxu0 0.0
        %592 = vmatprep.subr.mxu0 0.0
        %593 = vmatpush1.msra.mxu0 0.0
        %594 = vmatprep.mubr.f32.mxu0 0.0
        %595 = vmatmul.mubr.f32.gmra.mrb[0].mxu0 %v525
        %v596 = vpop.f32.mrb[0].mxu0
        %v597 = vadd.f32 0.0, %v596
        %v598 = vpop.f32.mrb[0].mxu0
        %599 = vmatprep.mubr.f32.mxu0 0.0
        %600 = vmatmul.mubr.f32.gmra.mrb[0].mxu0 %v528
        %v601 = vpop.f32.mrb[0].mxu0
        %v602 = vadd.f32 0.0, %v601
        %v603 = vpop.f32.mrb[0].mxu0
        %604 = vdwg.mxu0
        %605 = vst.msk [vmem:[%s209] sm:$0xff] %vm245, %v597
        %606 = vst.msk [vmem:[%s209 + $0x8] sm:$0xff] %vm245, %v602
        %s607 = sand.u32 %s103, 1
        %s608 = scalar_lea.sflag [#allocation3], %s607
        %s609 = sand.u32 %s103, 1
        %s610 = smul.addr %s609, 16
        %s611 = scalar_lea.vmem [#allocation2], %s610
        %s612 = sand.u32 %s129, 1
        %s613 = scalar_lea.sflag [#allocation5], %s612
        %s614 = sand.u32 %s129, 1
        %s615 = smul.addr %s614, 16
        %s616 = scalar_lea.vmem [#allocation4], %s615
        // Predicated region
        $region33: #{tpu_custom_call.1} parent=31 // pred_check
          %p617 = pneg %p113
        $region34: #{tpu_custom_call.1} parent=31 // pred_check_branch
          %619 = sbr.rel (%p617) target = $region36
        $region35: #{tpu_custom_call.1} parent=31 // pred_region
          %s621 = ssub.s32 256, 256
          %622 = vsyncadd %s608, %s621
          %s623 = smul.addr %s22, 2
          %s624 = smul.addr %s623, 128
          %s625 = scalar_lea.hbm %s3, %s624
          %s626 = sshll.u32 %s611, 4
          %s627 = int_to_ptr.vmem [resolvable:$true] %s626
          %632 = dma.vmem_to_hbm [thread:$0]  %s627, 256, %s625, %s608, 128, 128, 8
        $region36: #{tpu_custom_call.1} parent=31 // pred_fallthru
          _
        // Predicated region
        $region37: #{tpu_custom_call.1} parent=31 // pred_check
          %p633 = pneg %p139
        $region38: #{tpu_custom_call.1} parent=31 // pred_check_branch
          %635 = sbr.rel (%p633) target = $region40
        $region39: #{tpu_custom_call.1} parent=31 // pred_region
          %s637 = ssub.s32 256, 256
          %638 = vsyncadd %s613, %s637
          %s639 = smul.addr %s22, 2
          %s640 = smul.addr %s639, 128
          %s641 = scalar_lea.hbm %s4, %s640
          %s642 = sshll.u32 %s616, 4
          %s643 = int_to_ptr.vmem [resolvable:$true] %s642
          %648 = dma.vmem_to_hbm [thread:$0]  %s643, 256, %s641, %s613, 128, 128, 8
        $region40: #{tpu_custom_call.1} parent=31 // pred_fallthru
          _
      $region32: #{tpu_custom_call.1} parent=5 // pred_fallthru
        _
      %p649 = scmp.le.s32.totalorder 2, %s17
      // Predicated region
      $region41: #{tpu_custom_call.1} parent=5 // pred_check
        %p650 = pneg %p649
      $region42: #{tpu_custom_call.1} parent=5 // pred_check_branch
        %652 = sbr.rel (%p650) target = $region44
      $region43: #{tpu_custom_call.1} parent=5 // pred_region
        %s653 = ssub.s32 %s17, 2
        // Predicated region
        $region45: #{tpu_custom_call.1} parent=43 // pred_check
          %p654 = pneg %p119
        $region46: #{tpu_custom_call.1} parent=43 // pred_check_branch
          %656 = sbr.rel (%p654) target = $region48
        $region47: #{tpu_custom_call.1} parent=43 // pred_region
          %s657 = sand.u32 %s104, 1
          %s658 = scalar_lea.sflag [#allocation3], %s657
          %s659 = sand.u32 %s104, 1
          %s660 = smul.addr %s659, 16
          %s661 = scalar_lea.vmem [#allocation2], %s660
          %662 = dma.done %s658, 256
        $region48: #{tpu_custom_call.1} parent=43 // pred_fallthru
          _
        // Predicated region
        $region49: #{tpu_custom_call.1} parent=43 // pred_check
          %p663 = pneg %p145
        $region50: #{tpu_custom_call.1} parent=43 // pred_check_branch
          %665 = sbr.rel (%p663) target = $region52
        $region51: #{tpu_custom_call.1} parent=43 // pred_region
          %s666 = sand.u32 %s130, 1
          %s667 = scalar_lea.sflag [#allocation5], %s666
          %s668 = sand.u32 %s130, 1
          %s669 = smul.addr %s668, 16
          %s670 = scalar_lea.vmem [#allocation4], %s669
          %671 = dma.done %s667, 256
        $region52: #{tpu_custom_call.1} parent=43 // pred_fallthru
          _
      $region44: #{tpu_custom_call.1} parent=5 // pred_fallthru
        _
    $region6: #{tpu_custom_call.1} parent=1 // loop_footer
      %s21 = sadd.s32 1, %s17
    $region7: #{tpu_custom_call.1} parent=1 // loop_footer_branch
      %16 = sbr.rel target = $region3
    $region8: #{tpu_custom_call.1} parent=1 // loop_exit
      _
    %672 = vsyncpa [#allocation3], 1
    %s673 = scalar_lea.sflag [#allocation3], 1
    %674 = vsyncpa %s673, 1
    %675 = vsyncpa [#allocation5], 1
    %s676 = scalar_lea.sflag [#allocation5], 1
    %677 = vsyncpa %s676, 1

</llo_original>
